<compile_context>
chip_gen: v7x
topology: tpu7x:2x2x1
jax: 0.10.0
libtpu: 0.0.40
codegen_flags: <defaults>
</compile_context>

<pallas_src>
import numpy as np
import jax
import jax.numpy as jnp
from jax.experimental import pallas as pl
from jax.experimental.pallas import tpu as pltpu

LANE = 128
SUBLANE = 8


def _round_up(x, m):
    return ((x + m - 1) // m) * m


def _double_q_kernel(x_ref, w0_ref, w1_ref, w2_ref, bias_ref, out_ref):
    # Layer 0: single fused obs|action input; Q1 hidden in lanes [0:H],
    # Q2 hidden in lanes [H_pad:H_pad+H] of one 128-lane tile.
    h = jnp.dot(x_ref[...], w0_ref[...], preferred_element_type=jnp.float32)
    h = jnp.maximum(h + bias_ref[0:1, :], 0.0)
    # Layer 1: block-diagonal (Q1 block | Q2 block) -> one 128-wide matmul.
    h = jnp.dot(h, w1_ref[...], preferred_element_type=jnp.float32)
    h = jnp.maximum(h + bias_ref[1:2, :], 0.0)
    # Layer 2: both heads in one narrow matmul; q1 -> lane 0, q2 -> lane 1.
    o = jnp.dot(h, w2_ref[...], preferred_element_type=jnp.float32)
    out_ref[...] = o + bias_ref[2:3, 0:out_ref.shape[-1]]


def prepare_params(params_q1, params_q2, obs_dim, action_dim):
    """One-time padding + Q1/Q2 packing (run once, outside the hot path)."""
    assert len(params_q1) == 3 and len(params_q2) == 3, "expects hidden_depth == 2"
    (w0a, b0a), (w1a, b1a), (w2a, b2a) = params_q1
    (w0b, b0b), (w1b, b1b), (w2b, b2b) = params_q2
    D = obs_dim + action_dim
    H = w0a.shape[1]
    f32 = jnp.float32

    D_pad = _round_up(D, SUBLANE)            # sublane-aligned K; no 128-lane pad
    H2 = max(LANE, _round_up(2 * H, LANE))   # both hidden blocks share one lane tile
    H_pad = H2 // 2                          # >= H by construction
    O_pad = SUBLANE                          # narrow output: q1 lane 0, q2 lane 1

    # Layer-0 weight: single concatenated-input weight, Q1|Q2 packed along lanes.
    w0 = jnp.zeros((D_pad, H2), f32)
    w0 = w0.at[:D, :H].set(w0a.astype(f32))
    w0 = w0.at[:D, H_pad:H_pad + H].set(w0b.astype(f32))

    # Layer-1: block-diagonal.
    w1 = jnp.zeros((H2, H2), f32)
    w1 = w1.at[:H, :H].set(w1a.astype(f32))
    w1 = w1.at[H_pad:H_pad + H, H_pad:H_pad + H].set(w1b.astype(f32))

    # Layer-2: q1 in lane 0, q2 in lane 1.
    w2 = jnp.zeros((H2, O_pad), f32)
    w2 = w2.at[:H, 0:1].set(w2a.astype(f32))
    w2 = w2.at[H_pad:H_pad + H, 1:2].set(w2b.astype(f32))

    # All biases in one lane-dense buffer: row 0 = b0, row 1 = b1, row 2 = b2.
    biases = jnp.zeros((SUBLANE, H2), f32)
    biases = biases.at[0, :H].set(b0a.astype(f32))
    biases = biases.at[0, H_pad:H_pad + H].set(b0b.astype(f32))
    biases = biases.at[1, :H].set(b1a.astype(f32))
    biases = biases.at[1, H_pad:H_pad + H].set(b1b.astype(f32))
    biases = biases.at[2, 0].set(b2a[0].astype(f32))
    biases = biases.at[2, 1].set(b2b[0].astype(f32))

    return (w0, w1, w2, biases)


@jax.jit
def double_q_forward(obs, action, packed):
    """Returns (q1, q2), each of shape [B, 1], float32."""
    w0, w1, w2, biases = packed
    assert obs.shape[0] == action.shape[0]
    B = obs.shape[0]
    D = obs.shape[1] + action.shape[1]
    D_pad = w0.shape[0]
    H2 = w1.shape[0]
    O_pad = w2.shape[1]

    # Batch tiling: minimal row padding (< 8 rows per tile). nb >= 2 (and even)
    # whenever B > 256 so the "parallel" axis can shard across v7x's 2 TensorCores;
    # TB capped at 2048 (per-tile VMEM is far under the limit on all generations).
    TB_CAP = 2048
    nb = max(1, -(-B // TB_CAP))
    if B > 256:
        nb = max(nb, 2)
        nb += nb % 2
    TB = max(SUBLANE, _round_up(-(-B // nb), SUBLANE))
    B_pad = nb * TB

    # Single concat + pad of the activations (96 B/row, not 512 B/row).
    x = jnp.concatenate(
        [obs.astype(jnp.float32), action.astype(jnp.float32)], axis=-1)
    x = jnp.pad(x, ((0, B_pad - B), (0, D_pad - D)))

    def const(shape):
        # Constant index map -> fetched once, VMEM-resident across grid steps.
        return pl.BlockSpec(shape, lambda i: (0, 0))

    out = pl.pallas_call(
        _double_q_kernel,
        out_shape=jax.ShapeDtypeStruct((B_pad, O_pad), jnp.float32),
        grid_spec=pltpu.PrefetchScalarGridSpec(
            num_scalar_prefetch=0,
            grid=(nb,),
            in_specs=[
                pl.BlockSpec((TB, D_pad), lambda i: (i, 0)),
                const((D_pad, H2)),
                const((H2, H2)),
                const((H2, O_pad)),
                const((SUBLANE, H2)),
            ],
            out_specs=pl.BlockSpec((TB, O_pad), lambda i: (i, 0)),
        ),
        compiler_params=pltpu.CompilerParams(
            dimension_semantics=("parallel",)),
    )(x, w0, w1, w2, biases)

    q = out[:B, 0:2]
    return q[:, 0:1], q[:, 1:2]


def init_mlp_params(key, in_dim, hidden_dim, hidden_depth, out_dim):
    """Deterministic init. Weights stored as (in, out)."""
    dims = [in_dim] + [hidden_dim] * hidden_depth + [out_dim]
    params = []
    for i in range(len(dims) - 1):
        key, kw, kb = jax.random.split(key, 3)
        fan_in = dims[i]
        w = jax.random.normal(kw, (dims[i], dims[i + 1]), jnp.float32) / np.sqrt(fan_in)
        b = jax.random.normal(kb, (dims[i + 1],), jnp.float32) * 0.01
        params.append((w, b))
    return key, params


def reference_forward(obs, action, params_q1, params_q2):
    x = np.concatenate([np.asarray(obs), np.asarray(action)], axis=-1).astype(np.float32)

    def mlp(params):
        h = x
        n = len(params)
        for i, (w, b) in enumerate(params):
            h = h @ np.asarray(w) + np.asarray(b)
            if i < n - 1:
                h = np.maximum(h, 0.0)
        return h

    return mlp(params_q1), mlp(params_q2)


if __name__ == "__main__":
    # Small, forward-consistent shapes: obs_dim=17, action_dim=6 (e.g. HalfCheetah),
    # hidden_dim=32, hidden_depth=2, batch=2.
    batch, obs_dim, action_dim = 2, 17, 6
    hidden_dim, hidden_depth = 32, 2

    key = jax.random.PRNGKey(0)
    key, k_obs, k_act = jax.random.split(key, 3)
    obs = jax.random.normal(k_obs, (batch, obs_dim), jnp.float32)
    action = jax.random.normal(k_act, (batch, action_dim), jnp.float32)

    key, params_q1 = init_mlp_params(key, obs_dim + action_dim, hidden_dim,
                                     hidden_depth, 1)
    key, params_q2 = init_mlp_params(key, obs_dim + action_dim, hidden_dim,
                                     hidden_depth, 1)

    # One-time weight packing (hoisted out of the jitted forward).
    packed = jax.tree_util.tree_map(jax.block_until_ready,
                                    prepare_params(params_q1, params_q2,
                                                   obs_dim, action_dim))

    q1, q2 = double_q_forward(obs, action, packed)
    q1 = jax.block_until_ready(q1)
    q2 = jax.block_until_ready(q2)

    q1_ref, q2_ref = reference_forward(obs, action, params_q1, params_q2)
    np.testing.assert_allclose(np.asarray(q1), q1_ref, rtol=1e-5, atol=1e-5)
    np.testing.assert_allclose(np.asarray(q2), q2_ref, rtol=1e-5, atol=1e-5)
    assert q1.shape == (batch, 1) and q2.shape == (batch, 1)

    # Multi-tile sanity check (exercises the batch grid, nb = 2, ragged B).
    big_b = 520
    key, kb_obs, kb_act = jax.random.split(key, 3)
    obs_b = jax.random.normal(kb_obs, (big_b, obs_dim), jnp.float32)
    act_b = jax.random.normal(kb_act, (big_b, action_dim), jnp.float32)
    q1_b, q2_b = double_q_forward(obs_b, act_b, packed)
    q1_b = jax.block_until_ready(q1_b)
    q2_b = jax.block_until_ready(q2_b)
    q1_br, q2_br = reference_forward(obs_b, act_b, params_q1, params_q2)
    np.testing.assert_allclose(np.asarray(q1_b), q1_br, rtol=1e-4, atol=1e-4)
    np.testing.assert_allclose(np.asarray(q2_b), q2_br, rtol=1e-4, atol=1e-4)

    print("KERNEL_OK")
</pallas_src>

<mosaic_0001>
module attributes {stable_mosaic.version = 11 : i64} {
  func.func @_double_q_kernel(%arg0: i32, %arg1: memref<8x24xf32, #tpu.memory_space<vmem>>, %arg2: memref<24x128xf32, #tpu.memory_space<vmem>>, %arg3: memref<128x128xf32, #tpu.memory_space<vmem>>, %arg4: memref<128x8xf32, #tpu.memory_space<vmem>>, %arg5: memref<8x128xf32, #tpu.memory_space<vmem>>, %arg6: memref<8x8xf32, #tpu.memory_space<vmem>>) attributes {dimension_semantics = [#tpu.dimension_semantics<parallel>], iteration_bounds = array<i64: 1>, scalar_prefetch = 0 : i64, scratch_operands = 0 : i64, tpu.core_type = #tpu.core_type<tc>, window_params = [{transform_indices = @transform_0, window_bounds = array<i64: 8, 24>}, {pipeline_mode = #tpu.pipeline_mode<synchronous>, transform_indices = @transform_1, window_bounds = array<i64: 24, 128>}, {pipeline_mode = #tpu.pipeline_mode<synchronous>, transform_indices = @transform_2, window_bounds = array<i64: 128, 128>}, {pipeline_mode = #tpu.pipeline_mode<synchronous>, transform_indices = @transform_3, window_bounds = array<i64: 128, 8>}, {pipeline_mode = #tpu.pipeline_mode<synchronous>, transform_indices = @transform_4, window_bounds = array<i64: 8, 128>}, {transform_indices = @transform_5, window_bounds = array<i64: 8, 8>}]} {
    %c0 = arith.constant 0 : index
    %c0_0 = arith.constant 0 : index
    %0 = vector.load %arg1[%c0, %c0_0] : memref<8x24xf32, #tpu.memory_space<vmem>>, vector<8x24xf32>
    %c0_1 = arith.constant 0 : index
    %c0_2 = arith.constant 0 : index
    %1 = vector.load %arg2[%c0_1, %c0_2] : memref<24x128xf32, #tpu.memory_space<vmem>>, vector<24x128xf32>
    %cst = arith.constant dense<0.000000e+00> : vector<8x128xf32>
    %2 = tpu.matmul %0, %1, %cst {dimension_numbers = #tpu.dot_dimension_numbers<[1], [0], [0], [1], [0, 0, 1, 1], [], []>} : vector<8x24xf32>, vector<24x128xf32>, vector<8x128xf32> -> vector<8x128xf32>
    %c0_3 = arith.constant 0 : index
    %c0_4 = arith.constant 0 : index
    %3 = vector.load %arg5[%c0_3, %c0_4] : memref<8x128xf32, #tpu.memory_space<vmem>>, vector<1x128xf32>
    %4 = vector.broadcast %3 : vector<1x128xf32> to vector<8x128xf32>
    %5 = arith.addf %2, %4 : vector<8x128xf32>
    %cst_5 = arith.constant 0.000000e+00 : f32
    %6 = vector.broadcast %cst_5 : f32 to vector<8x128xf32>
    %7 = arith.maximumf %5, %6 : vector<8x128xf32>
    %c0_6 = arith.constant 0 : index
    %c0_7 = arith.constant 0 : index
    %8 = vector.load %arg3[%c0_6, %c0_7] : memref<128x128xf32, #tpu.memory_space<vmem>>, vector<128x128xf32>
    %cst_8 = arith.constant dense<0.000000e+00> : vector<8x128xf32>
    %9 = tpu.matmul %7, %8, %cst_8 {dimension_numbers = #tpu.dot_dimension_numbers<[1], [0], [0], [1], [0, 0, 1, 1], [], []>} : vector<8x128xf32>, vector<128x128xf32>, vector<8x128xf32> -> vector<8x128xf32>
    %c1 = arith.constant 1 : index
    %c0_9 = arith.constant 0 : index
    %10 = vector.load %arg5[%c1, %c0_9] : memref<8x128xf32, #tpu.memory_space<vmem>>, vector<1x128xf32>
    %11 = vector.broadcast %10 : vector<1x128xf32> to vector<8x128xf32>
    %12 = arith.addf %9, %11 : vector<8x128xf32>
    %cst_10 = arith.constant 0.000000e+00 : f32
    %13 = vector.broadcast %cst_10 : f32 to vector<8x128xf32>
    %14 = arith.maximumf %12, %13 : vector<8x128xf32>
    %c0_11 = arith.constant 0 : index
    %c0_12 = arith.constant 0 : index
    %15 = vector.load %arg4[%c0_11, %c0_12] : memref<128x8xf32, #tpu.memory_space<vmem>>, vector<128x8xf32>
    %cst_13 = arith.constant dense<0.000000e+00> : vector<8x8xf32>
    %16 = tpu.matmul %14, %15, %cst_13 {dimension_numbers = #tpu.dot_dimension_numbers<[1], [0], [0], [1], [0, 0, 1, 1], [], []>} : vector<8x128xf32>, vector<128x8xf32>, vector<8x8xf32> -> vector<8x8xf32>
    %c2 = arith.constant 2 : index
    %c0_14 = arith.constant 0 : index
    %17 = vector.load %arg5[%c2, %c0_14] : memref<8x128xf32, #tpu.memory_space<vmem>>, vector<1x8xf32>
    %18 = vector.broadcast %17 : vector<1x8xf32> to vector<8x8xf32>
    %19 = arith.addf %16, %18 : vector<8x8xf32>
    %c0_15 = arith.constant 0 : index
    %c0_16 = arith.constant 0 : index
    %20 = vector.load %arg6[%c0_15, %c0_16] : memref<8x8xf32, #tpu.memory_space<vmem>>, vector<8x8xf32>
    tpu.vector_store %arg6[%c0_15, %c0_16], %19 {strides = array<i32>} : memref<8x8xf32, #tpu.memory_space<vmem>>, vector<8x8xf32>,
    return
  }
  func.func @transform_0(%arg0: i32) -> (i32, i32) {
    %c0_i32 = arith.constant 0 : i32
    %c0_i32_0 = arith.constant 0 : i32
    return %arg0, %c0_i32 : i32, i32
  }
  func.func @transform_1(%arg0: i32) -> (i32, i32) {
    %c0_i32 = arith.constant 0 : i32
    %c0_i32_0 = arith.constant 0 : i32
    %c0_i32_1 = arith.constant 0 : i32
    return %c0_i32, %c0_i32_0 : i32, i32
  }
  func.func @transform_2(%arg0: i32) -> (i32, i32) {
    %c0_i32 = arith.constant 0 : i32
    %c0_i32_0 = arith.constant 0 : i32
    %c0_i32_1 = arith.constant 0 : i32
    return %c0_i32, %c0_i32_0 : i32, i32
  }
  func.func @transform_3(%arg0: i32) -> (i32, i32) {
    %c0_i32 = arith.constant 0 : i32
    %c0_i32_0 = arith.constant 0 : i32
    %c0_i32_1 = arith.constant 0 : i32
    return %c0_i32, %c0_i32_0 : i32, i32
  }
  func.func @transform_4(%arg0: i32) -> (i32, i32) {
    %c0_i32 = arith.constant 0 : i32
    %c0_i32_0 = arith.constant 0 : i32
    %c0_i32_1 = arith.constant 0 : i32
    return %c0_i32, %c0_i32_0 : i32, i32
  }
  func.func @transform_5(%arg0: i32) -> (i32, i32) {
    %c0_i32 = arith.constant 0 : i32
    %c0_i32_0 = arith.constant 0 : i32
    return %arg0, %c0_i32 : i32, i32
  }
}

</mosaic_0001>

<llo_original>
// kernel: double_q_forward.1
$region0: #{double_q_forward.1}
  #allocation0 [shape = 'u32[]', space=smem, size = 0x4, offset = 0x4, fixed_abs, tag = 'smem constant byte address 0x4 - core index']
  #allocation1 [shape = 'u32[144,128]{1,0:T(1,128)}', space=vmem, size = 0x12000, scoped, tag = 'internal scratch']
  %s0 = inlined_call_operand.vmem [shape: f32[8,24], index: 0, kind: input, shape index: {}]
  %s1 = inlined_call_operand.vmem [shape: f32[24,128], index: 1, kind: input, shape index: {}]
  %s2 = inlined_call_operand.vmem [shape: f32[128,128], index: 2, kind: input, shape index: {}]
  %s3 = inlined_call_operand.vmem [shape: f32[128,8], index: 3, kind: input, shape index: {}]
  %s4 = inlined_call_operand.hbm [shape: f32[8,128], index: 4, kind: input, shape index: {}]
  %s5 = inlined_call_operand.vmem [shape: f32[8,8], index: 5, kind: output, shape index: {}]
  %s6 = sld [smem:[#allocation0]]
  $region34: #{double_q_forward.1} parent=0
    _
  %s8 = ssub.s32 1, %s6
  %s9 = scalar_select 0, %s8, %s6
  $region1: #{double_q_forward.1} parent=0
    #allocation2 [shape = 'u8[4096]{0}', space=vmem, size = 0x1000, scoped, tag = 'input window, operand 4, single buffered']
    #allocation3 [shape = 's32[1]{0}', space=sflag, size = 0x4, scoped, tag = 'scoped memory for double_q_forward.1']
    %10 = vsyncpa [#allocation3], 0
    // Predicated region
    $region2: #{double_q_forward.1} parent=1 // pred_check
      _
    $region3: #{double_q_forward.1} parent=1 // pred_check_branch
      %12 = sbr.rel (0) target = $region5
    $region4: #{double_q_forward.1} parent=1 // pred_region
      _
    $region5: #{double_q_forward.1} parent=1 // pred_fallthru
      _
    // Predicated region
    $region6: #{double_q_forward.1} parent=1 // pred_check
      _
    $region7: #{double_q_forward.1} parent=1 // pred_check_branch
      %14 = sbr.rel (0) target = $region9
    $region8: #{double_q_forward.1} parent=1 // pred_region
      _
    $region9: #{double_q_forward.1} parent=1 // pred_fallthru
      _
    // Predicated region
    $region10: #{double_q_forward.1} parent=1 // pred_check
      _
    $region11: #{double_q_forward.1} parent=1 // pred_check_branch
      %16 = sbr.rel (0) target = $region13
    $region12: #{double_q_forward.1} parent=1 // pred_region
      _
    $region13: #{double_q_forward.1} parent=1 // pred_fallthru
      _
    // Predicated region
    $region14: #{double_q_forward.1} parent=1 // pred_check
      _
    $region15: #{double_q_forward.1} parent=1 // pred_check_branch
      %18 = sbr.rel (0) target = $region17
    $region16: #{double_q_forward.1} parent=1 // pred_region
      _
    $region17: #{double_q_forward.1} parent=1 // pred_fallthru
      _
    // Predicated region
    $region18: #{double_q_forward.1} parent=1 // pred_check
      _
    $region19: #{double_q_forward.1} parent=1 // pred_check_branch
      %20 = sbr.rel (0) target = $region21
    $region20: #{double_q_forward.1} parent=1 // pred_region
      %s22 = ssub.s32 128, 128
      %23 = vsyncadd [#allocation3], %s22
      %s25 = sshll.u32 [#allocation2], 4
      %s26 = int_to_ptr.vmem [resolvable:$true] %s25
      %28 = dma.hbm_to_vmem [thread:$0]  %s4, 128, %s26, [#allocation3]
    $region21: #{double_q_forward.1} parent=1 // pred_fallthru
      _
    // Predicated region
    $region22: #{double_q_forward.1} parent=1 // pred_check
      _
    $region23: #{double_q_forward.1} parent=1 // pred_check_branch
      %30 = sbr.rel (0) target = $region25
    $region24: #{double_q_forward.1} parent=1 // pred_region
      %31 = dma.done [#allocation3], 128
    $region25: #{double_q_forward.1} parent=1 // pred_fallthru
      _
    %v32 = vld [vmem:[%s0] sm:$0xff]
    %v33 = vld [vmem:[%s1] sm:$0xff]
    %v34 = vld [vmem:[%s1 + $0x8] sm:$0xff]
    %v35 = vld [vmem:[%s1 + $0x10] sm:$0xff]
    %v36 = vld [vmem:[#allocation2] sm:$0x1]
    %v37 = vlaneseq
    %v38 = vshrl.u32 %v37, 7
    %v39 = vsub.s32 0, %v38
    %v40 = vrot.slane %v36, %v39
    %vm41 = vcmask 195584
    %v43 = vsel %vm41, %v32, 0
    %45 = vmatprep.subr.mxu0 0.0
    %46 = vmatpush1.msra.mxu0 %v33
    %47 = vmatprep.subr.mxu0 0.0
    %48 = vmatpush1.msra.mxu0 %v34
    %49 = vmatprep.subr.mxu0 0.0
    %50 = vmatpush1.msra.mxu0 %v35
    %51 = vmatprep.subr.mxu0 0.0
    %52 = vmatpush1.msra.mxu0 0.0
    %53 = vmatprep.subr.mxu0 0.0
    %54 = vmatpush1.msra.mxu0 0.0
    %55 = vmatprep.subr.mxu0 0.0
    %56 = vmatpush1.msra.mxu0 0.0
    %57 = vmatprep.subr.mxu0 0.0
    %58 = vmatpush1.msra.mxu0 0.0
    %59 = vmatprep.subr.mxu0 0.0
    %60 = vmatpush1.msra.mxu0 0.0
    %61 = vmatprep.subr.mxu0 0.0
    %62 = vmatpush1.msra.mxu0 0.0
    %63 = vmatprep.subr.mxu0 0.0
    %64 = vmatpush1.msra.mxu0 0.0
    %65 = vmatprep.subr.mxu0 0.0
    %66 = vmatpush1.msra.mxu0 0.0
    %67 = vmatprep.subr.mxu0 0.0
    %68 = vmatpush1.msra.mxu0 0.0
    %69 = vmatprep.subr.mxu0 0.0
    %70 = vmatpush1.msra.mxu0 0.0
    %71 = vmatprep.subr.mxu0 0.0
    %72 = vmatpush1.msra.mxu0 0.0
    %73 = vmatprep.subr.mxu0 0.0
    %74 = vmatpush1.msra.mxu0 0.0
    %75 = vmatprep.subr.mxu0 0.0
    %76 = vmatpush1.msra.mxu0 0.0
    %77 = vmatprep.subr.mxu0 0.0
    %78 = vmatpush1.msra.mxu0 0.0
    %79 = vmatprep.subr.mxu0 0.0
    %80 = vmatpush1.msra.mxu0 0.0
    %81 = vmatprep.subr.mxu0 0.0
    %82 = vmatpush1.msra.mxu0 0.0
    %83 = vmatprep.subr.mxu0 0.0
    %84 = vmatpush1.msra.mxu0 0.0
    %85 = vmatprep.subr.mxu0 0.0
    %86 = vmatpush1.msra.mxu0 0.0
    %87 = vmatprep.subr.mxu0 0.0
    %88 = vmatpush1.msra.mxu0 0.0
    %89 = vmatprep.subr.mxu0 0.0
    %90 = vmatpush1.msra.mxu0 0.0
    %91 = vmatprep.subr.mxu0 0.0
    %92 = vmatpush1.msra.mxu0 0.0
    %93 = vmatprep.subr.mxu0 0.0
    %94 = vmatpush1.msra.mxu0 0.0
    %95 = vmatprep.subr.mxu0 0.0
    %96 = vmatpush1.msra.mxu0 0.0
    %97 = vmatprep.subr.mxu0 0.0
    %98 = vmatpush1.msra.mxu0 0.0
    %99 = vmatprep.subr.mxu0 0.0
    %100 = vmatpush1.msra.mxu0 0.0
    %101 = vmatprep.subr.mxu0 0.0
    %102 = vmatpush1.msra.mxu0 0.0
    %103 = vmatprep.subr.mxu0 0.0
    %104 = vmatpush1.msra.mxu0 0.0
    %105 = vmatprep.subr.mxu0 0.0
    %106 = vmatpush1.msra.mxu0 0.0
    %107 = vmatprep.subr.mxu0 0.0
    %108 = vmatpush1.msra.mxu0 0.0
    %109 = vmatprep.mubr.f32.mxu0 0.0
    %110 = vmatmul.mubr.f32.gmra.mrb[0].mxu0 %v43
    %v111 = vpop.f32.mrb[0].mxu0
    %v112 = vadd.f32 %v40, %v111
    %v113 = vpop.f32.mrb[0].mxu0
    %114 = vdwg.mxu0
    %v115 = vmax.f32 %v112, 0.0
    %v116 = vld [vmem:[%s2] sm:$0xff]
    %v117 = vld [vmem:[%s2 + $0x8] sm:$0xff]
    %v118 = vld [vmem:[%s2 + $0x10] sm:$0xff]
    %v119 = vld [vmem:[%s2 + $0x18] sm:$0xff]
    %v120 = vld [vmem:[%s2 + $0x20] sm:$0xff]
    %v121 = vld [vmem:[%s2 + $0x28] sm:$0xff]
    %v122 = vld [vmem:[%s2 + $0x30] sm:$0xff]
    %v123 = vld [vmem:[%s2 + $0x38] sm:$0xff]
    %v124 = vld [vmem:[%s2 + $0x40] sm:$0xff]
    %v125 = vld [vmem:[%s2 + $0x48] sm:$0xff]
    %v126 = vld [vmem:[%s2 + $0x50] sm:$0xff]
    %v127 = vld [vmem:[%s2 + $0x58] sm:$0xff]
    %v128 = vld [vmem:[%s2 + $0x60] sm:$0xff]
    %v129 = vld [vmem:[%s2 + $0x68] sm:$0xff]
    %v130 = vld [vmem:[%s2 + $0x70] sm:$0xff]
    %v131 = vld [vmem:[%s2 + $0x78] sm:$0xff]
    %v132 = vld [vmem:[#allocation2 + $0x1] sm:$0x1]
    %v133 = vlaneseq
    %v134 = vshrl.u32 %v133, 7
    %v135 = vsub.s32 0, %v134
    %v136 = vrot.slane %v132, %v135
    %137 = vmatprep.subr.mxu0 0.0
    %138 = vmatpush1.msra.mxu0 %v116
    %139 = vmatprep.subr.mxu0 0.0
    %140 = vmatpush1.msra.mxu0 %v117
    %141 = vmatprep.subr.mxu0 0.0
    %142 = vmatpush1.msra.mxu0 %v118
    %143 = vmatprep.subr.mxu0 0.0
    %144 = vmatpush1.msra.mxu0 %v119
    %145 = vmatprep.subr.mxu0 0.0
    %146 = vmatpush1.msra.mxu0 %v120
    %147 = vmatprep.subr.mxu0 0.0
    %148 = vmatpush1.msra.mxu0 %v121
    %149 = vmatprep.subr.mxu0 0.0
    %150 = vmatpush1.msra.mxu0 %v122
    %151 = vmatprep.subr.mxu0 0.0
    %152 = vmatpush1.msra.mxu0 %v123
    %153 = vmatprep.subr.mxu0 0.0
    %154 = vmatpush1.msra.mxu0 %v124
    %155 = vmatprep.subr.mxu0 0.0
    %156 = vmatpush1.msra.mxu0 %v125
    %157 = vmatprep.subr.mxu0 0.0
    %158 = vmatpush1.msra.mxu0 %v126
    %159 = vmatprep.subr.mxu0 0.0
    %160 = vmatpush1.msra.mxu0 %v127
    %161 = vmatprep.subr.mxu0 0.0
    %162 = vmatpush1.msra.mxu0 %v128
    %163 = vmatprep.subr.mxu0 0.0
    %164 = vmatpush1.msra.mxu0 %v129
    %165 = vmatprep.subr.mxu0 0.0
    %166 = vmatpush1.msra.mxu0 %v130
    %167 = vmatprep.subr.mxu0 0.0
    %168 = vmatpush1.msra.mxu0 %v131
    %169 = vmatprep.subr.mxu0 0.0
    %170 = vmatpush1.msra.mxu0 0.0
    %171 = vmatprep.subr.mxu0 0.0
    %172 = vmatpush1.msra.mxu0 0.0
    %173 = vmatprep.subr.mxu0 0.0
    %174 = vmatpush1.msra.mxu0 0.0
    %175 = vmatprep.subr.mxu0 0.0
    %176 = vmatpush1.msra.mxu0 0.0
    %177 = vmatprep.subr.mxu0 0.0
    %178 = vmatpush1.msra.mxu0 0.0
    %179 = vmatprep.subr.mxu0 0.0
    %180 = vmatpush1.msra.mxu0 0.0
    %181 = vmatprep.subr.mxu0 0.0
    %182 = vmatpush1.msra.mxu0 0.0
    %183 = vmatprep.subr.mxu0 0.0
    %184 = vmatpush1.msra.mxu0 0.0
    %185 = vmatprep.subr.mxu0 0.0
    %186 = vmatpush1.msra.mxu0 0.0
    %187 = vmatprep.subr.mxu0 0.0
    %188 = vmatpush1.msra.mxu0 0.0
    %189 = vmatprep.subr.mxu0 0.0
    %190 = vmatpush1.msra.mxu0 0.0
    %191 = vmatprep.subr.mxu0 0.0
    %192 = vmatpush1.msra.mxu0 0.0
    %193 = vmatprep.subr.mxu0 0.0
    %194 = vmatpush1.msra.mxu0 0.0
    %195 = vmatprep.subr.mxu0 0.0
    %196 = vmatpush1.msra.mxu0 0.0
    %197 = vmatprep.subr.mxu0 0.0
    %198 = vmatpush1.msra.mxu0 0.0
    %199 = vmatprep.subr.mxu0 0.0
    %200 = vmatpush1.msra.mxu0 0.0
    %201 = vmatprep.mubr.f32.mxu0 0.0
    %202 = vmatmul.mubr.f32.gmra.mrb[0].mxu0 %v115
    %v203 = vpop.f32.mrb[0].mxu0
    %v204 = vadd.f32 %v136, %v203
    %v205 = vpop.f32.mrb[0].mxu0
    %206 = vdwg.mxu0
    %v207 = vmax.f32 %v204, 0.0
    %v208 = vld [vmem:[%s3] sm:$0xff]
    %v209 = vld [vmem:[%s3 + $0x8] sm:$0xff]
    %v210 = vld [vmem:[%s3 + $0x10] sm:$0xff]
    %v211 = vld [vmem:[%s3 + $0x18] sm:$0xff]
    %v212 = vld [vmem:[%s3 + $0x20] sm:$0xff]
    %v213 = vld [vmem:[%s3 + $0x28] sm:$0xff]
    %v214 = vld [vmem:[%s3 + $0x30] sm:$0xff]
    %v215 = vld [vmem:[%s3 + $0x38] sm:$0xff]
    %v216 = vld [vmem:[%s3 + $0x40] sm:$0xff]
    %v217 = vld [vmem:[%s3 + $0x48] sm:$0xff]
    %v218 = vld [vmem:[%s3 + $0x50] sm:$0xff]
    %v219 = vld [vmem:[%s3 + $0x58] sm:$0xff]
    %v220 = vld [vmem:[%s3 + $0x60] sm:$0xff]
    %v221 = vld [vmem:[%s3 + $0x68] sm:$0xff]
    %v222 = vld [vmem:[%s3 + $0x70] sm:$0xff]
    %v223 = vld [vmem:[%s3 + $0x78] sm:$0xff]
    %v224 = vld [vmem:[#allocation2 + $0x2] sm:$0x1]
    %v225 = vlaneseq
    %v226 = vshrl.u32 %v225, 7
    %v227 = vsub.s32 0, %v226
    %v228 = vrot.slane %v224, %v227
    %229 = vmatprep.subr.mxu0 0.0
    %230 = vmatpush1.msra.mxu0 %v208
    %231 = vmatprep.subr.mxu0 0.0
    %232 = vmatpush1.msra.mxu0 %v209
    %233 = vmatprep.subr.mxu0 0.0
    %234 = vmatpush1.msra.mxu0 %v210
    %235 = vmatprep.subr.mxu0 0.0
    %236 = vmatpush1.msra.mxu0 %v211
    %237 = vmatprep.subr.mxu0 0.0
    %238 = vmatpush1.msra.mxu0 %v212
    %239 = vmatprep.subr.mxu0 0.0
    %240 = vmatpush1.msra.mxu0 %v213
    %241 = vmatprep.subr.mxu0 0.0
    %242 = vmatpush1.msra.mxu0 %v214
    %243 = vmatprep.subr.mxu0 0.0
    %244 = vmatpush1.msra.mxu0 %v215
    %245 = vmatprep.subr.mxu0 0.0
    %246 = vmatpush1.msra.mxu0 %v216
    %247 = vmatprep.subr.mxu0 0.0
    %248 = vmatpush1.msra.mxu0 %v217
    %249 = vmatprep.subr.mxu0 0.0
    %250 = vmatpush1.msra.mxu0 %v218
    %251 = vmatprep.subr.mxu0 0.0
    %252 = vmatpush1.msra.mxu0 %v219
    %253 = vmatprep.subr.mxu0 0.0
    %254 = vmatpush1.msra.mxu0 %v220
    %255 = vmatprep.subr.mxu0 0.0
    %256 = vmatpush1.msra.mxu0 %v221
    %257 = vmatprep.subr.mxu0 0.0
    %258 = vmatpush1.msra.mxu0 %v222
    %259 = vmatprep.subr.mxu0 0.0
    %260 = vmatpush1.msra.mxu0 %v223
    %261 = vmatprep.subr.mxu0 0.0
    %262 = vmatpush1.msra.mxu0 0.0
    %263 = vmatprep.subr.mxu0 0.0
    %264 = vmatpush1.msra.mxu0 0.0
    %265 = vmatprep.subr.mxu0 0.0
    %266 = vmatpush1.msra.mxu0 0.0
    %267 = vmatprep.subr.mxu0 0.0
    %268 = vmatpush1.msra.mxu0 0.0
    %269 = vmatprep.subr.mxu0 0.0
    %270 = vmatpush1.msra.mxu0 0.0
    %271 = vmatprep.subr.mxu0 0.0
    %272 = vmatpush1.msra.mxu0 0.0
    %273 = vmatprep.subr.mxu0 0.0
    %274 = vmatpush1.msra.mxu0 0.0
    %275 = vmatprep.subr.mxu0 0.0
    %276 = vmatpush1.msra.mxu0 0.0
    %277 = vmatprep.subr.mxu0 0.0
    %278 = vmatpush1.msra.mxu0 0.0
    %279 = vmatprep.subr.mxu0 0.0
    %280 = vmatpush1.msra.mxu0 0.0
    %281 = vmatprep.subr.mxu0 0.0
    %282 = vmatpush1.msra.mxu0 0.0
    %283 = vmatprep.subr.mxu0 0.0
    %284 = vmatpush1.msra.mxu0 0.0
    %285 = vmatprep.subr.mxu0 0.0
    %286 = vmatpush1.msra.mxu0 0.0
    %287 = vmatprep.subr.mxu0 0.0
    %288 = vmatpush1.msra.mxu0 0.0
    %289 = vmatprep.subr.mxu0 0.0
    %290 = vmatpush1.msra.mxu0 0.0
    %291 = vmatprep.subr.mxu0 0.0
    %292 = vmatpush1.msra.mxu0 0.0
    %293 = vmatprep.mubr.f32.mxu0 0.0
    %294 = vmatmul.mubr.f32.gmra.mrb[0].mxu0 %v207
    %v295 = vpop.f32.mrb[0].mxu0
    %v296 = vadd.f32 %v228, %v295
    %v297 = vpop.f32.mrb[0].mxu0
    %298 = vdwg.mxu0
    %vm299 = vcmask 64512
    %300 = vst.msk [vmem:[%s5] sm:$0xff] %vm299, %v296
    // Predicated region
    $region26: #{double_q_forward.1} parent=1 // pred_check
      _
    $region27: #{double_q_forward.1} parent=1 // pred_check_branch
      %302 = sbr.rel (0) target = $region29
    $region28: #{double_q_forward.1} parent=1 // pred_region
      _
    $region29: #{double_q_forward.1} parent=1 // pred_fallthru
      _
    // Predicated region
    $region30: #{double_q_forward.1} parent=1 // pred_check
      _
    $region31: #{double_q_forward.1} parent=1 // pred_check_branch
      %304 = sbr.rel (0) target = $region33
    $region32: #{double_q_forward.1} parent=1 // pred_region
      _
    $region33: #{double_q_forward.1} parent=1 // pred_fallthru
      _
    %305 = vsyncpa [#allocation3], 1

</llo_original>
